<compile_context>
chip_gen: v7x
topology: tpu7x:2x2x1
jax: 0.10.0
libtpu: 0.0.40
codegen_flags: <defaults>
</compile_context>

<pallas_src>
import jax
import jax.numpy as jnp
from jax.experimental import pallas as pl
from jax.experimental.pallas import tpu as pltpu


def _copy_kernel(x_ref, o_ref):
    # Pure identity: full-tile VMEM copy.
    o_ref[...] = x_ref[...]


def _sublane_pack(dtype) -> int:
    # Sublane packing factor: f32 -> 8, bf16/f16 -> 16, int8/fp8 -> 32.
    itemsize = jnp.dtype(dtype).itemsize
    return 8 * max(1, 4 // itemsize)


def identity(x: jax.Array) -> jax.Array:
    """Pallas implementation of Identity.forward: returns x unchanged.

    NOTE: the zero-cost implementation is simply `return x`; this wrapper
    routes through a tiled, lane-dense, pipelined copy kernel to demonstrate
    the optimal kernel structure for a memory-bound op.
    """
    if x.size == 0:
        return x

    orig_shape = x.shape
    total = x.size
    itemsize = jnp.dtype(x.dtype).itemsize

    # --- Lane-dense 2-D layout: last dim a multiple of 128 lanes. ----------
    lanes = 128
    for cand in (1024, 512, 256, 128):
        if total % cand == 0:
            lanes = cand
            break

    flat = x.reshape(-1)
    pad = (-total) % lanes
    if pad:
        flat = jnp.pad(flat, (0, pad))
    rows = flat.size // lanes
    x2d = flat.reshape(rows, lanes)

    # --- Row tile ~2 MiB: double-buffered in + out (4 live buffers ~ 8 MiB)
    # fits v5e's 16 MiB default scoped VMEM, and v6e/v7x comfortably. --------
    target_tile_bytes = 2 * 1024 * 1024
    block_rows = min(rows, max(1, target_tile_bytes // (lanes * itemsize)))
    pack = _sublane_pack(x.dtype)
    if block_rows < rows:
        # Keep the second-minor block dim aligned to the sublane pack factor
        # (8 / 16 / 32 for 32- / 16- / 8-bit dtypes).
        block_rows = min(rows, max(pack, (block_rows // pack) * pack))
    grid = (pl.cdiv(rows, block_rows),)

    y2d = pl.pallas_call(
        _copy_kernel,
        out_shape=jax.ShapeDtypeStruct((rows, lanes), x.dtype),
        grid=grid,
        in_specs=[pl.BlockSpec((block_rows, lanes), lambda i: (i, 0))],
        out_specs=pl.BlockSpec((block_rows, lanes), lambda i: (i, 0)),
        # Let XLA reuse the input buffer for the output (elide allocation).
        input_output_aliases={0: 0},
        compiler_params=pltpu.CompilerParams(
            # 1-D copy grid: shard across v7x's 2 TensorCores; harmless on
            # single-TC v5e/v6e.
            dimension_semantics=("parallel",),
            vmem_limit_bytes=32 * 1024 * 1024,
        ),
    )(x2d)

    y = y2d.reshape(-1)
    if pad:
        y = y[:total]
    return y.reshape(orig_shape)


if __name__ == "__main__":
    key = jax.random.PRNGKey(0)
    # Small NCHW input consistent with typical conv-feature usage of Identity.
    x = jax.random.normal(key, (2, 4, 16, 16), dtype=jnp.float32)

    y = identity(x)
    jax.block_until_ready(y)

    assert y.shape == x.shape and y.dtype == x.dtype
    assert bool(jnp.all(y == x))
    print("KERNEL_OK")
</pallas_src>

<mosaic_0001>
module attributes {stable_mosaic.version = 11 : i64} {
  func.func @_copy_kernel(%arg0: i32, %arg1: memref<2x1024xf32, #tpu.memory_space<vmem>>, %arg2: memref<2x1024xf32, #tpu.memory_space<vmem>>) attributes {dimension_semantics = [#tpu.dimension_semantics<parallel>], iteration_bounds = array<i64: 1>, scalar_prefetch = 0 : i64, scratch_operands = 0 : i64, tpu.core_type = #tpu.core_type<tc>, window_params = [{transform_indices = @transform_0, window_bounds = array<i64: 2, 1024>}, {transform_indices = @transform_1, window_bounds = array<i64: 2, 1024>}]} {
    %c0 = arith.constant 0 : index
    %c0_0 = arith.constant 0 : index
    %0 = vector.load %arg1[%c0, %c0_0] : memref<2x1024xf32, #tpu.memory_space<vmem>>, vector<2x1024xf32>
    %c0_1 = arith.constant 0 : index
    %c0_2 = arith.constant 0 : index
    %1 = vector.load %arg2[%c0_1, %c0_2] : memref<2x1024xf32, #tpu.memory_space<vmem>>, vector<2x1024xf32>
    tpu.vector_store %arg2[%c0_1, %c0_2], %0 {strides = array<i32>} : memref<2x1024xf32, #tpu.memory_space<vmem>>, vector<2x1024xf32>,
    return
  }
  func.func @transform_0(%arg0: i32) -> (i32, i32) {
    %c0_i32 = arith.constant 0 : i32
    %c0_i32_0 = arith.constant 0 : i32
    return %arg0, %c0_i32 : i32, i32
  }
  func.func @transform_1(%arg0: i32) -> (i32, i32) {
    %c0_i32 = arith.constant 0 : i32
    %c0_i32_0 = arith.constant 0 : i32
    return %arg0, %c0_i32 : i32, i32
  }
}

</mosaic_0001>

<llo_original>
// kernel: tpu_custom_call.1
$region0: #{tpu_custom_call.1}
  #allocation0 [shape = 'u32[]', space=smem, size = 0x4, offset = 0x4, fixed_abs, tag = 'smem constant byte address 0x4 - core index']
  #allocation1 [shape = 'u32[144,128]{1,0:T(1,128)}', space=vmem, size = 0x12000, scoped, tag = 'internal scratch']
  %s0 = inlined_call_operand.hbm [shape: f32[2,1024], index: 0, kind: input, shape index: {}, may-alias: {0,1}]
  %s1 = inlined_call_operand.hbm [shape: f32[2,1024], index: 1, kind: output, shape index: {}, may-alias: {0,1}]
  %s2 = sld [smem:[#allocation0]]
  $region18: #{tpu_custom_call.1} parent=0
    _
  %s4 = ssub.s32 1, %s2
  %s5 = scalar_select 0, %s4, %s2
  $region1: #{tpu_custom_call.1} parent=0
    #allocation2 [shape = 'u8[8192]{0}', space=vmem, size = 0x2000, scoped, tag = 'input window, operand 0, single buffered']
    #allocation3 [shape = 's32[1]{0}', space=sflag, size = 0x4, scoped, tag = 'scoped memory for tpu_custom_call.1']
    #allocation4 [shape = 's32[1]{0}', space=sflag, size = 0x4, scoped, tag = 'scoped memory for tpu_custom_call.1']
    #allocation5 [shape = 'u8[8192]{0}', space=vmem, size = 0x2000, scoped, tag = 'output window, operand 0, single buffered']
    %6 = vsyncpa [#allocation3], 0
    %7 = vsyncpa [#allocation4], 0
    // Predicated region
    $region2: #{tpu_custom_call.1} parent=1 // pred_check
      _
    $region3: #{tpu_custom_call.1} parent=1 // pred_check_branch
      %9 = sbr.rel (0) target = $region5
    $region4: #{tpu_custom_call.1} parent=1 // pred_region
      %s11 = ssub.s32 256, 256
      %12 = vsyncadd [#allocation3], %s11
      %s14 = sshll.u32 [#allocation2], 4
      %s15 = int_to_ptr.vmem [resolvable:$true] %s14
      %17 = dma.hbm_to_vmem [thread:$0]  %s0, 256, %s15, [#allocation3]
    $region5: #{tpu_custom_call.1} parent=1 // pred_fallthru
      _
    // Predicated region
    $region6: #{tpu_custom_call.1} parent=1 // pred_check
      _
    $region7: #{tpu_custom_call.1} parent=1 // pred_check_branch
      %19 = sbr.rel (0) target = $region9
    $region8: #{tpu_custom_call.1} parent=1 // pred_region
      %20 = dma.done [#allocation3], 256
    $region9: #{tpu_custom_call.1} parent=1 // pred_fallthru
      _
    %v21 = vld [vmem:[#allocation2] sm:$0xff]
    %v22 = vld [vmem:[#allocation2 + $0x8] sm:$0xff]
    %23 = vst [vmem:[#allocation5] sm:$0xff] %v21
    %24 = vst [vmem:[#allocation5 + $0x8] sm:$0xff] %v22
    // Predicated region
    $region10: #{tpu_custom_call.1} parent=1 // pred_check
      _
    $region11: #{tpu_custom_call.1} parent=1 // pred_check_branch
      %26 = sbr.rel (0) target = $region13
    $region12: #{tpu_custom_call.1} parent=1 // pred_region
      %s28 = ssub.s32 256, 256
      %29 = vsyncadd [#allocation4], %s28
      %s31 = sshll.u32 [#allocation5], 4
      %s32 = int_to_ptr.vmem [resolvable:$true] %s31
      %34 = dma.vmem_to_hbm [thread:$0]  %s32, 256, %s1, [#allocation4]
    $region13: #{tpu_custom_call.1} parent=1 // pred_fallthru
      _
    // Predicated region
    $region14: #{tpu_custom_call.1} parent=1 // pred_check
      _
    $region15: #{tpu_custom_call.1} parent=1 // pred_check_branch
      %36 = sbr.rel (0) target = $region17
    $region16: #{tpu_custom_call.1} parent=1 // pred_region
      %37 = dma.done [#allocation4], 256
    $region17: #{tpu_custom_call.1} parent=1 // pred_fallthru
      _
    %38 = vsyncpa [#allocation3], 1
    %39 = vsyncpa [#allocation4], 1

</llo_original>
